<compile_context>
chip_gen: v6e
topology: v6e:2x2x1
jax: 0.10.0
libtpu: 0.0.40
codegen_flags: <defaults>
</compile_context>

<pallas_src>
import functools

import jax
import jax.numpy as jnp
from jax.experimental import pallas as pl
from jax.experimental.pallas import tpu as pltpu


LEAKY_SLOPE = 0.01  # nn.LeakyReLU() default negative_slope
BN_EPS = 1e-5       # nn.BatchNorm1d default eps


def _round_up(x: int, m: int) -> int:
    return int(pl.cdiv(x, m)) * m


# ----------------------------------------------------------------------------
# One-time hardware / capability queries (cached)
# ----------------------------------------------------------------------------
@functools.lru_cache(maxsize=1)
def _vmem_budget_bytes() -> int:
    """Generation-aware scoped-VMEM budget with compiler headroom."""
    try:
        phys = int(pltpu.get_tpu_info().vmem_capacity_bytes)
        # Leave >=16 MiB for compiler scratch / MXU staging / spill slots and
        # never ask for more than ~100 MiB even on 128-MiB parts.
        return int(min(phys - (16 << 20), 100 << 20))
    except Exception:
        # Conservative fallback that is safe on every generation (incl. v7x).
        return 48 << 20


@functools.lru_cache(maxsize=1)
def _num_tensorcores() -> int:
    """Best-effort TensorCore-per-chip count (v7x has 2, v5e/v6e have 1)."""
    try:
        info = pltpu.get_tpu_info()
        for name in ("num_cores", "tensorcores_per_chip", "cores_per_chip",
                     "num_tensorcores"):
            v = getattr(info, name, None)
            if v:
                return int(v)
    except Exception:
        pass
    return 1


@functools.lru_cache(maxsize=1)
def _buffered_one_supported() -> bool:
    """Narrow one-time probe: does this build accept pl.Buffered(1)?

    Lowers a trivial kernel (cannot VMEM-OOM), so any failure here really is
    "Buffered(1) unsupported" -- unlike the old broad try/except around the
    real pallas_call.
    """
    try:
        mode = pl.Buffered(1)

        def tiny(x_ref, o_ref):
            o_ref[...] = x_ref[...] + 1.0

        fn = pl.pallas_call(
            tiny,
            out_shape=jax.ShapeDtypeStruct((8, 128), jnp.float32),
            grid=(1,),
            in_specs=[pl.BlockSpec((8, 128), lambda i: (0, 0),
                                   pipeline_mode=mode)],
            out_specs=pl.BlockSpec((8, 128), lambda i: (0, 0)),
        )
        jax.jit(fn).lower(jax.ShapeDtypeStruct((8, 128), jnp.float32))
        return True
    except Exception:
        return False


# ----------------------------------------------------------------------------
# Kernel
# ----------------------------------------------------------------------------
def _head_kernel(x_ref, w1_ref, b1_ref, w2_ref, b2_ref, o_ref, *acc,
                 activation_type: str, num_k: int):
    # x: (TM, TK)  w1: (TK, HID)  b1: (1, HID)  w2: (HID, OUT_PAD)  b2: (1, OUT_PAD)
    w1 = w1_ref[...]
    partial = jnp.dot(x_ref[...].astype(w1.dtype), w1,
                      preferred_element_type=jnp.float32)

    def _finish(z1_pre):
        z1 = z1_pre + b1_ref[...]
        if activation_type == "leaky_relu":
            a = jnp.where(z1 >= 0, z1, LEAKY_SLOPE * z1)
        elif activation_type == "tanh":
            # TODO(synk): with bf16 matmuls the lone EUP can become the binding
            # unit on v5e/v6e; a VPU rational tanh approximation could replace
            # this if a bundle dump shows the EUP slot saturating.
            a = jnp.tanh(z1)
        else:
            raise ValueError(f"unknown activation type: {activation_type}")
        w2 = w2_ref[...]
        out = jnp.dot(a.astype(w2.dtype), w2,
                      preferred_element_type=jnp.float32) + b2_ref[...]
        o_ref[...] = out.astype(o_ref.dtype)

    if num_k == 1:
        # Whole reduction in one shot; no accumulator scratch needed.
        _finish(partial)
    else:
        (acc_ref,) = acc
        k = pl.program_id(1)

        @pl.when(k == 0)
        def _init():
            acc_ref[...] = jnp.zeros_like(acc_ref)

        acc_ref[...] += partial

        @pl.when(k == num_k - 1)
        def _done():
            _finish(acc_ref[...])


# ----------------------------------------------------------------------------
# One-time parameter preparation (constant folding into parameters)
# ----------------------------------------------------------------------------
def prepare_params(params, *, weights_dtype=jnp.bfloat16):
    """Call once per parameter set, outside the per-forward path."""
    w1, b1 = params["w1"], params["b1"]
    gamma, beta = params["gamma"], params["beta"]
    mean, var = params["running_mean"], params["running_var"]
    w2, b2 = params["w2"], params["b2"]

    hid, in_f = w1.shape
    out_f = w2.shape[0]
    assert w2.shape == (out_f, hid)

    # Fold eval-mode BatchNorm:  (x @ W1^T + b1) * scale + shift
    #                          =  x @ (W1^T * scale) + (b1 * scale + shift)
    inv_std = 1.0 / jnp.sqrt(var + BN_EPS)
    scale = gamma * inv_std
    shift = beta - mean * gamma * inv_std

    w1p = (w1.T.astype(jnp.float32) * scale[None, :]).astype(weights_dtype)    # (in_f, hid)
    b1p = (b1 * scale + shift).reshape(1, hid).astype(jnp.float32)             # (1, hid)

    # Lane-pad output features to a multiple of 128 (dense stores / full MXU N).
    out_pad = _round_up(out_f, 128)
    w2p = jnp.zeros((hid, out_pad), weights_dtype)
    w2p = w2p.at[:, :out_f].set(w2.T.astype(weights_dtype))                    # (hid, out_pad)
    b2p = jnp.zeros((1, out_pad), jnp.float32).at[:, :out_f].set(b2)

    return dict(w1p=w1p, b1p=b1p, w2p=w2p, b2p=b2p,
                in_f=in_f, hid=hid, out_f=out_f, out_pad=out_pad)


# ----------------------------------------------------------------------------
# pallas_call builder
# ----------------------------------------------------------------------------
def _pallas_forward(x, prepped, *, activation_type: str, block_m: int):
    n, in_f = x.shape
    w1p, b1p, w2p, b2p = (prepped["w1p"], prepped["b1p"],
                          prepped["w2p"], prepped["b2p"])
    hid, out_pad = w2p.shape
    out_dtype = x.dtype
    w_isz = jnp.dtype(w1p.dtype).itemsize
    x_isz = jnp.dtype(x.dtype).itemsize

    budget = _vmem_budget_bytes()
    buffered = _buffered_one_supported()

    # --- batch (M) tile --------------------------------------------------
    # NOTE: block_m is worth sweeping in {128, 256, 512} per generation; 256
    # is a reasonable default (z1 spill vs step-overhead trade-off).
    bm = max(8, min(_round_up(block_m, 8), _round_up(n, 8)))
    cores = _num_tensorcores()
    min_m_steps = 2 * cores if cores > 1 else 1   # >=2 steps per TC for overlap
    if min_m_steps > 1:
        while int(pl.cdiv(n, bm)) < min_m_steps and bm > 8:
            bm = max(8, _round_up(bm // 2, 8))

    # --- K tile: stream w1 across a reduction grid axis when it is large --
    tk = in_f
    if tk * hid * w_isz > budget // 3:
        while (tk % 256 == 0 and
               2 * tk * hid * w_isz + 2 * bm * tk * x_isz > budget // 2):
            tk //= 2
    num_k = in_f // tk

    # --- shrink bm if per-step tiles would dominate the VMEM budget -------
    def _tile_bytes(bm_):
        return (2 * bm_ * tk * x_isz                 # x tiles (double-buffered)
                + 2 * bm_ * out_pad * x_isz          # out tiles (double-buffered)
                + (bm_ * hid * 4 if num_k > 1 else 0))  # f32 accumulator
    while bm > 8 and _tile_bytes(bm) > budget // 2:
        bm = max(8, _round_up(bm // 2, 8))

    num_m = int(pl.cdiv(n, bm))

    # --- buffering modes & VMEM limit -------------------------------------
    inv_mode = pl.Buffered(1) if buffered else None          # grid-invariant operands
    w1_mode = inv_mode if num_k == 1 else None                # streamed w1 stays 2x
    w1_bufs = 1 if (num_k == 1 and buffered) else 2
    small_bufs = 1 if buffered else 2

    needed = (_tile_bytes(bm)
              + w1_bufs * tk * hid * w_isz
              + small_bufs * (hid * 4 + hid * out_pad * w_isz + out_pad * 4))
    vmem_limit = int(min(budget, max(int(needed * 1.4) + (4 << 20), 32 << 20)))

    kernel = functools.partial(_head_kernel,
                               activation_type=activation_type, num_k=num_k)

    return pl.pallas_call(
        kernel,
        out_shape=jax.ShapeDtypeStruct((n, out_pad), out_dtype),
        grid_spec=pltpu.PrefetchScalarGridSpec(
            num_scalar_prefetch=0,
            grid=(num_m, num_k),
            in_specs=[
                # Batch- and K-tiled activations (double-buffered).
                pl.BlockSpec((bm, tk), lambda i, k: (i, k)),
                # First weight: resident (num_k==1) or streamed over K.
                pl.BlockSpec((tk, hid), lambda i, k: (k, 0),
                             pipeline_mode=w1_mode),
                # Grid-invariant operands: single-buffered when supported.
                pl.BlockSpec((1, hid), lambda i, k: (0, 0),
                             pipeline_mode=inv_mode),
                pl.BlockSpec((hid, out_pad), lambda i, k: (0, 0),
                             pipeline_mode=inv_mode),
                pl.BlockSpec((1, out_pad), lambda i, k: (0, 0),
                             pipeline_mode=inv_mode),
            ],
            out_specs=pl.BlockSpec((bm, out_pad), lambda i, k: (i, 0)),
            scratch_shapes=([pltpu.VMEM((bm, hid), jnp.float32)]
                            if num_k > 1 else []),
        ),
        compiler_params=pltpu.CompilerParams(
            dimension_semantics=("parallel", "arbitrary"),
            vmem_limit_bytes=vmem_limit,
        ),
    )(x, w1p, b1p, w2p, b2p)


# ----------------------------------------------------------------------------
# Public wrapper
# ----------------------------------------------------------------------------
def wae_linear_head(h, prepped, *, activation_type: str = "leaky_relu",
                    block_m: int = 256):
    """h: any shape (N, ...) that flattens to (N, 1024*s)."""
    n = h.shape[0]
    x = h.reshape(n, -1)  # nn.Flatten()
    assert x.shape[1] == prepped["in_f"], (x.shape[1], prepped["in_f"])

    out = _pallas_forward(x, prepped, activation_type=activation_type,
                          block_m=block_m)
    # Strip the lane padding of the output features.
    return out[:, :prepped["out_f"]]


# ----------------------------------------------------------------------------
# Parameter init + references
# ----------------------------------------------------------------------------
def init_params(key, s: int):
    in_f, hid, out_f = 1024 * s, 256 * s, 64 * s
    k = jax.random.split(key, 6)
    bnd1 = 1.0 / jnp.sqrt(in_f)
    bnd2 = 1.0 / jnp.sqrt(hid)
    return dict(
        w1=jax.random.uniform(k[0], (hid, in_f), jnp.float32, -bnd1, bnd1),
        b1=jax.random.uniform(k[1], (hid,), jnp.float32, -bnd1, bnd1),
        gamma=jnp.ones((hid,), jnp.float32),
        beta=jnp.zeros((hid,), jnp.float32),
        running_mean=0.1 * jax.random.normal(k[2], (hid,), jnp.float32),
        running_var=jnp.abs(1.0 + 0.1 * jax.random.normal(k[3], (hid,), jnp.float32)),
        w2=jax.random.uniform(k[4], (out_f, hid), jnp.float32, -bnd2, bnd2),
        b2=jax.random.uniform(k[5], (out_f,), jnp.float32, -bnd2, bnd2),
    )


def reference_forward(h, params, *, activation_type: str):
    """PyTorch eval-mode semantics in full f32 (no weight quantization)."""
    n = h.shape[0]
    x = h.reshape(n, -1)
    z1 = x @ params["w1"].T + params["b1"]
    inv_std = 1.0 / jnp.sqrt(params["running_var"] + BN_EPS)
    z1 = (z1 - params["running_mean"]) * inv_std * params["gamma"] + params["beta"]
    if activation_type == "leaky_relu":
        a = jnp.where(z1 >= 0, z1, LEAKY_SLOPE * z1)
    else:
        a = jnp.tanh(z1)
    return a @ params["w2"].T + params["b2"]


def prepped_reference(h, prepped, *, activation_type: str):
    """Same bf16-rounded operands as the kernel, plain-JAX math (tight check)."""
    n = h.shape[0]
    x = h.reshape(n, -1)
    wdt = prepped["w1p"].dtype
    xq = x.astype(wdt).astype(jnp.float32)
    z1 = xq @ prepped["w1p"].astype(jnp.float32) + prepped["b1p"]
    if activation_type == "leaky_relu":
        a = jnp.where(z1 >= 0, z1, LEAKY_SLOPE * z1)
    else:
        a = jnp.tanh(z1)
    aq = a.astype(wdt).astype(jnp.float32)
    out = aq @ prepped["w2p"].astype(jnp.float32) + prepped["b2p"]
    return out[:, :prepped["out_f"]]


if __name__ == "__main__":
    s = 1
    batch = 2
    key = jax.random.PRNGKey(0)
    k_x, k_p = jax.random.split(key)

    raw_params = init_params(k_p, s)
    prepped = prepare_params(raw_params)   # one-time fold / transpose / pad / bf16

    # Input: anything that flattens to 1024*s features, e.g. (N, 64*s, 4, 4).
    x = jax.random.normal(k_x, (batch, 64 * s, 4, 4), jnp.float32)

    for act in ("leaky_relu", "tanh"):
        out = jax.block_until_ready(
            wae_linear_head(x, prepped, activation_type=act))
        assert out.shape == (batch, 64 * s), out.shape

        # Tight check vs. a plain-JAX model that uses the exact same bf16
        # weights (catches kernel/tiling bugs).
        ref_q = prepped_reference(x, prepped, activation_type=act)
        assert jnp.allclose(out, ref_q, atol=2e-3, rtol=2e-3), (
            f"{act}: kernel vs bf16 reference max err "
            f"{float(jnp.max(jnp.abs(out - ref_q)))}")

        # Loose check vs. full-f32 PyTorch eval-mode semantics (bf16 weights
        # trade a little precision for 2-3x MXU throughput).
        ref = reference_forward(x, raw_params, activation_type=act)
        assert jnp.allclose(out, ref, atol=3e-2, rtol=3e-2), (
            f"{act}: kernel vs f32 reference max err "
            f"{float(jnp.max(jnp.abs(out - ref)))}")

    print("KERNEL_OK")
</pallas_src>

<mosaic_0001>
module attributes {stable_mosaic.version = 11 : i64} {
  func.func @_head_kernel(%arg0: i32, %arg1: i32, %arg2: memref<8x1024xf32, #tpu.memory_space<vmem>>, %arg3: memref<1024x256xbf16, #tpu.memory_space<vmem>>, %arg4: memref<1x256xf32, #tpu.memory_space<vmem>>, %arg5: memref<256x128xbf16, #tpu.memory_space<vmem>>, %arg6: memref<1x128xf32, #tpu.memory_space<vmem>>, %arg7: memref<8x128xf32, #tpu.memory_space<vmem>>) attributes {dimension_semantics = [#tpu.dimension_semantics<parallel>, #tpu.dimension_semantics<arbitrary>], iteration_bounds = array<i64: 1, 1>, scalar_prefetch = 0 : i64, scratch_operands = 0 : i64, tpu.core_type = #tpu.core_type<tc>, window_params = [{transform_indices = @transform_0, window_bounds = array<i64: 8, 1024>}, {transform_indices = @transform_1, window_bounds = array<i64: 1024, 256>}, {pipeline_mode = #tpu.pipeline_mode<synchronous>, transform_indices = @transform_2, window_bounds = array<i64: 1, 256>}, {pipeline_mode = #tpu.pipeline_mode<synchronous>, transform_indices = @transform_3, window_bounds = array<i64: 256, 128>}, {pipeline_mode = #tpu.pipeline_mode<synchronous>, transform_indices = @transform_4, window_bounds = array<i64: 1, 128>}, {transform_indices = @transform_5, window_bounds = array<i64: 8, 128>}]} {
    %c0 = arith.constant 0 : index
    %c0_0 = arith.constant 0 : index
    %0 = vector.load %arg3[%c0, %c0_0] : memref<1024x256xbf16, #tpu.memory_space<vmem>>, vector<1024x256xbf16>
    %c0_1 = arith.constant 0 : index
    %c0_2 = arith.constant 0 : index
    %1 = vector.load %arg2[%c0_1, %c0_2] : memref<8x1024xf32, #tpu.memory_space<vmem>>, vector<8x1024xf32>
    %2 = arith.truncf %1 : vector<8x1024xf32> to vector<8x1024xbf16>
    %cst = arith.constant dense<0.000000e+00> : vector<8x256xf32>
    %3 = tpu.matmul %2, %0, %cst {dimension_numbers = #tpu.dot_dimension_numbers<[1], [0], [0], [1], [0, 0, 1, 1], [], []>} : vector<8x1024xbf16>, vector<1024x256xbf16>, vector<8x256xf32> -> vector<8x256xf32>
    %c0_3 = arith.constant 0 : index
    %c0_4 = arith.constant 0 : index
    %4 = vector.load %arg4[%c0_3, %c0_4] : memref<1x256xf32, #tpu.memory_space<vmem>>, vector<1x256xf32>
    %5 = vector.broadcast %4 : vector<1x256xf32> to vector<8x256xf32>
    %6 = arith.addf %3, %5 : vector<8x256xf32>
    %cst_5 = arith.constant 0.000000e+00 : f32
    %7 = vector.broadcast %cst_5 : f32 to vector<8x256xf32>
    %8 = arith.cmpf oge, %6, %7 : vector<8x256xf32>
    %cst_6 = arith.constant 0.00999999977 : f32
    %9 = vector.broadcast %cst_6 : f32 to vector<8x256xf32>
    %10 = arith.mulf %9, %6 : vector<8x256xf32>
    %11 = arith.select %8, %6, %10 : vector<8x256xi1>, vector<8x256xf32>
    %c0_7 = arith.constant 0 : index
    %c0_8 = arith.constant 0 : index
    %12 = vector.load %arg5[%c0_7, %c0_8] : memref<256x128xbf16, #tpu.memory_space<vmem>>, vector<256x128xbf16>
    %13 = arith.truncf %11 : vector<8x256xf32> to vector<8x256xbf16>
    %cst_9 = arith.constant dense<0.000000e+00> : vector<8x128xf32>
    %14 = tpu.matmul %13, %12, %cst_9 {dimension_numbers = #tpu.dot_dimension_numbers<[1], [0], [0], [1], [0, 0, 1, 1], [], []>} : vector<8x256xbf16>, vector<256x128xbf16>, vector<8x128xf32> -> vector<8x128xf32>
    %c0_10 = arith.constant 0 : index
    %c0_11 = arith.constant 0 : index
    %15 = vector.load %arg6[%c0_10, %c0_11] : memref<1x128xf32, #tpu.memory_space<vmem>>, vector<1x128xf32>
    %16 = vector.broadcast %15 : vector<1x128xf32> to vector<8x128xf32>
    %17 = arith.addf %14, %16 : vector<8x128xf32>
    %c0_12 = arith.constant 0 : index
    %c0_13 = arith.constant 0 : index
    %18 = vector.load %arg7[%c0_12, %c0_13] : memref<8x128xf32, #tpu.memory_space<vmem>>, vector<8x128xf32>
    tpu.vector_store %arg7[%c0_12, %c0_13], %17 {strides = array<i32>} : memref<8x128xf32, #tpu.memory_space<vmem>>, vector<8x128xf32>,
    return
  }
  func.func @transform_0(%arg0: i32, %arg1: i32) -> (i32, i32) {
    %c0_i32 = arith.constant 0 : i32
    return %arg0, %arg1 : i32, i32
  }
  func.func @transform_1(%arg0: i32, %arg1: i32) -> (i32, i32) {
    %c0_i32 = arith.constant 0 : i32
    %c0_i32_0 = arith.constant 0 : i32
    return %arg1, %c0_i32 : i32, i32
  }
  func.func @transform_2(%arg0: i32, %arg1: i32) -> (i32, i32) {
    %c0_i32 = arith.constant 0 : i32
    %c0_i32_0 = arith.constant 0 : i32
    %c0_i32_1 = arith.constant 0 : i32
    return %c0_i32, %c0_i32_0 : i32, i32
  }
  func.func @transform_3(%arg0: i32, %arg1: i32) -> (i32, i32) {
    %c0_i32 = arith.constant 0 : i32
    %c0_i32_0 = arith.constant 0 : i32
    %c0_i32_1 = arith.constant 0 : i32
    return %c0_i32, %c0_i32_0 : i32, i32
  }
  func.func @transform_4(%arg0: i32, %arg1: i32) -> (i32, i32) {
    %c0_i32 = arith.constant 0 : i32
    %c0_i32_0 = arith.constant 0 : i32
    %c0_i32_1 = arith.constant 0 : i32
    return %c0_i32, %c0_i32_0 : i32, i32
  }
  func.func @transform_5(%arg0: i32, %arg1: i32) -> (i32, i32) {
    %c0_i32 = arith.constant 0 : i32
    %c0_i32_0 = arith.constant 0 : i32
    return %arg0, %c0_i32 : i32, i32
  }
}

</mosaic_0001>

<llo_original>
// kernel: tpu_custom_call.1
$region0: #{tpu_custom_call.1}
  #allocation0 [shape = 'u32[]', space=smem, size = 0x4, offset = 0x4, fixed_abs, tag = 'smem constant byte address 0x4 - core index']
  #allocation1 [shape = 'u32[144,128]{1,0:T(1,128)}', space=vmem, size = 0x12000, scoped, tag = 'internal scratch']
  %s0 = inlined_call_operand.hbm [shape: f32[2,1024], index: 0, kind: input, shape index: {}]
  %s1 = inlined_call_operand.hbm [shape: bf16[1024,256], index: 1, kind: input, shape index: {}]
  %s2 = inlined_call_operand.vmem [shape: f32[1,256], index: 2, kind: input, shape index: {}]
  %s3 = inlined_call_operand.hbm [shape: bf16[256,128], index: 3, kind: input, shape index: {}]
  %s4 = inlined_call_operand.vmem [shape: f32[1,128], index: 4, kind: input, shape index: {}]
  %s5 = inlined_call_operand.hbm [shape: f32[2,128], index: 5, kind: output, shape index: {}]
  %s6 = sld [smem:[#allocation0]]
  $region42: #{tpu_custom_call.1} parent=0
    _
  %s8 = ssub.s32 1, %s6
  %s9 = scalar_select 0, %s8, %s6
  $region1: #{tpu_custom_call.1} parent=0
    #allocation2 [shape = 'u8[32768]{0}', space=vmem, size = 0x8000, scoped, tag = 'input window, operand 0, single buffered']
    #allocation3 [shape = 's32[1]{0}', space=sflag, size = 0x4, scoped, tag = 'scoped memory for tpu_custom_call.1']
    #allocation4 [shape = 's32[1]{0}', space=sflag, size = 0x4, scoped, tag = 'scoped memory for tpu_custom_call.1']
    #allocation5 [shape = 'u8[524288]{0}', space=vmem, size = 0x80000, scoped, tag = 'input window, operand 1, single buffered']
    #allocation6 [shape = 's32[1]{0}', space=sflag, size = 0x4, scoped, tag = 'scoped memory for tpu_custom_call.1']
    #allocation7 [shape = 'u8[65536]{0}', space=vmem, size = 0x10000, scoped, tag = 'input window, operand 3, single buffered']
    #allocation8 [shape = 'u8[4096]{0}', space=vmem, size = 0x1000, scoped, tag = 'output window, operand 0, single buffered']
    %10 = vsyncpa [#allocation3], 0
    %11 = vsyncpa [#allocation6], 0
    %12 = vsyncpa [#allocation4], 0
    // Predicated region
    $region2: #{tpu_custom_call.1} parent=1 // pred_check
      _
    $region3: #{tpu_custom_call.1} parent=1 // pred_check_branch
      %14 = sbr.rel (0) target = $region5
    $region4: #{tpu_custom_call.1} parent=1 // pred_region
      %s16 = ssub.s32 1024, 256
      %17 = vsyncadd [#allocation3], %s16
      %s18 = sshll.u32 [#allocation2], 4
      %s19 = int_to_ptr.vmem [resolvable:$true] %s18
      %24 = dma.hbm_to_vmem [thread:$0]  %s0, 256, %s19, [#allocation3], 256, 256, 16
    $region5: #{tpu_custom_call.1} parent=1 // pred_fallthru
      _
    // Predicated region
    $region6: #{tpu_custom_call.1} parent=1 // pred_check
      _
    $region7: #{tpu_custom_call.1} parent=1 // pred_check_branch
      %26 = sbr.rel (0) target = $region9
    $region8: #{tpu_custom_call.1} parent=1 // pred_region
      %s28 = ssub.s32 16384, 16384
      %29 = vsyncadd [#allocation6], %s28
      %s30 = sshll.u32 [#allocation5], 4
      %s31 = int_to_ptr.vmem [resolvable:$true] %s30
      %36 = dma.hbm_to_vmem [thread:$0]  %s1, 16384, %s31, [#allocation6], 128, 128, 8
    $region9: #{tpu_custom_call.1} parent=1 // pred_fallthru
      _
    // Predicated region
    $region10: #{tpu_custom_call.1} parent=1 // pred_check
      _
    $region11: #{tpu_custom_call.1} parent=1 // pred_check_branch
      %38 = sbr.rel (0) target = $region13
    $region12: #{tpu_custom_call.1} parent=1 // pred_region
      _
    $region13: #{tpu_custom_call.1} parent=1 // pred_fallthru
      _
    // Predicated region
    $region14: #{tpu_custom_call.1} parent=1 // pred_check
      _
    $region15: #{tpu_custom_call.1} parent=1 // pred_check_branch
      %40 = sbr.rel (0) target = $region17
    $region16: #{tpu_custom_call.1} parent=1 // pred_region
      %s42 = ssub.s32 2048, 2048
      %43 = vsyncadd [#allocation6], %s42
      %s44 = sshll.u32 [#allocation7], 4
      %s45 = int_to_ptr.vmem [resolvable:$true] %s44
      %50 = dma.hbm_to_vmem [thread:$0]  %s3, 2048, %s45, [#allocation6], 64, 64, 4
    $region17: #{tpu_custom_call.1} parent=1 // pred_fallthru
      _
    // Predicated region
    $region18: #{tpu_custom_call.1} parent=1 // pred_check
      _
    $region19: #{tpu_custom_call.1} parent=1 // pred_check_branch
      %52 = sbr.rel (0) target = $region21
    $region20: #{tpu_custom_call.1} parent=1 // pred_region
      _
    $region21: #{tpu_custom_call.1} parent=1 // pred_fallthru
      _
    // Predicated region
    $region22: #{tpu_custom_call.1} parent=1 // pred_check
      _
    $region23: #{tpu_custom_call.1} parent=1 // pred_check_branch
      %54 = sbr.rel (0) target = $region25
    $region24: #{tpu_custom_call.1} parent=1 // pred_region
      %55 = dma.done [#allocation3], 1024
    $region25: #{tpu_custom_call.1} parent=1 // pred_fallthru
      _
    // Predicated region
    $region26: #{tpu_custom_call.1} parent=1 // pred_check
      _
    $region27: #{tpu_custom_call.1} parent=1 // pred_check_branch
      %57 = sbr.rel (0) target = $region29
    $region28: #{tpu_custom_call.1} parent=1 // pred_region
      %58 = dma.done [#allocation6], 16384
    $region29: #{tpu_custom_call.1} parent=1 // pred_fallthru
      _
    // Predicated region
    $region30: #{tpu_custom_call.1} parent=1 // pred_check
      _
    $region31: #{tpu_custom_call.1} parent=1 // pred_check_branch
      %60 = sbr.rel (0) target = $region33
    $region32: #{tpu_custom_call.1} parent=1 // pred_region
      %61 = dma.done [#allocation6], 2048
    $region33: #{tpu_custom_call.1} parent=1 // pred_fallthru
      _
    %v63 = vld [vmem:[#allocation5] sm:$0xff]
    %v64 = vld [vmem:[#allocation5 + $0x8] sm:$0xff]
    %v65 = vld [vmem:[#allocation5 + $0x10] sm:$0xff]
    %v66 = vld [vmem:[#allocation5 + $0x18] sm:$0xff]
    %v67 = vld [vmem:[#allocation5 + $0x20] sm:$0xff]
    %v68 = vld [vmem:[#allocation5 + $0x28] sm:$0xff]
    %v69 = vld [vmem:[#allocation5 + $0x30] sm:$0xff]
    %v70 = vld [vmem:[#allocation5 + $0x38] sm:$0xff]
    %v71 = vld [vmem:[#allocation5 + $0x40] sm:$0xff]
    %v72 = vld [vmem:[#allocation5 + $0x48] sm:$0xff]
    %v73 = vld [vmem:[#allocation5 + $0x50] sm:$0xff]
    %v74 = vld [vmem:[#allocation5 + $0x58] sm:$0xff]
    %v75 = vld [vmem:[#allocation5 + $0x60] sm:$0xff]
    %v76 = vld [vmem:[#allocation5 + $0x68] sm:$0xff]
    %v77 = vld [vmem:[#allocation5 + $0x70] sm:$0xff]
    %v78 = vld [vmem:[#allocation5 + $0x78] sm:$0xff]
    %v79 = vld [vmem:[#allocation5 + $0x80] sm:$0xff]
    %v80 = vld [vmem:[#allocation5 + $0x88] sm:$0xff]
    %v81 = vld [vmem:[#allocation5 + $0x90] sm:$0xff]
    %v82 = vld [vmem:[#allocation5 + $0x98] sm:$0xff]
    %v83 = vld [vmem:[#allocation5 + $0xa0] sm:$0xff]
    %v84 = vld [vmem:[#allocation5 + $0xa8] sm:$0xff]
    %v85 = vld [vmem:[#allocation5 + $0xb0] sm:$0xff]
    %v86 = vld [vmem:[#allocation5 + $0xb8] sm:$0xff]
    %v87 = vld [vmem:[#allocation5 + $0xc0] sm:$0xff]
    %v88 = vld [vmem:[#allocation5 + $0xc8] sm:$0xff]
    %v89 = vld [vmem:[#allocation5 + $0xd0] sm:$0xff]
    %v90 = vld [vmem:[#allocation5 + $0xd8] sm:$0xff]
    %v91 = vld [vmem:[#allocation5 + $0xe0] sm:$0xff]
    %v92 = vld [vmem:[#allocation5 + $0xe8] sm:$0xff]
    %v93 = vld [vmem:[#allocation5 + $0xf0] sm:$0xff]
    %v94 = vld [vmem:[#allocation5 + $0xf8] sm:$0xff]
    %v95 = vld [vmem:[#allocation5 + $0x100] sm:$0xff]
    %v96 = vld [vmem:[#allocation5 + $0x108] sm:$0xff]
    %v97 = vld [vmem:[#allocation5 + $0x110] sm:$0xff]
    %v98 = vld [vmem:[#allocation5 + $0x118] sm:$0xff]
    %v99 = vld [vmem:[#allocation5 + $0x120] sm:$0xff]
    %v100 = vld [vmem:[#allocation5 + $0x128] sm:$0xff]
    %v101 = vld [vmem:[#allocation5 + $0x130] sm:$0xff]
    %v102 = vld [vmem:[#allocation5 + $0x138] sm:$0xff]
    %v103 = vld [vmem:[#allocation5 + $0x140] sm:$0xff]
    %v104 = vld [vmem:[#allocation5 + $0x148] sm:$0xff]
    %v105 = vld [vmem:[#allocation5 + $0x150] sm:$0xff]
    %v106 = vld [vmem:[#allocation5 + $0x158] sm:$0xff]
    %v107 = vld [vmem:[#allocation5 + $0x160] sm:$0xff]
    %v108 = vld [vmem:[#allocation5 + $0x168] sm:$0xff]
    %v109 = vld [vmem:[#allocation5 + $0x170] sm:$0xff]
    %v110 = vld [vmem:[#allocation5 + $0x178] sm:$0xff]
    %v111 = vld [vmem:[#allocation5 + $0x180] sm:$0xff]
    %v112 = vld [vmem:[#allocation5 + $0x188] sm:$0xff]
    %v113 = vld [vmem:[#allocation5 + $0x190] sm:$0xff]
    %v114 = vld [vmem:[#allocation5 + $0x198] sm:$0xff]
    %v115 = vld [vmem:[#allocation5 + $0x1a0] sm:$0xff]
    %v116 = vld [vmem:[#allocation5 + $0x1a8] sm:$0xff]
    %v117 = vld [vmem:[#allocation5 + $0x1b0] sm:$0xff]
    %v118 = vld [vmem:[#allocation5 + $0x1b8] sm:$0xff]
    %v119 = vld [vmem:[#allocation5 + $0x1c0] sm:$0xff]
    %v120 = vld [vmem:[#allocation5 + $0x1c8] sm:$0xff]
    %v121 = vld [vmem:[#allocation5 + $0x1d0] sm:$0xff]
    %v122 = vld [vmem:[#allocation5 + $0x1d8] sm:$0xff]
    %v123 = vld [vmem:[#allocation5 + $0x1e0] sm:$0xff]
    %v124 = vld [vmem:[#allocation5 + $0x1e8] sm:$0xff]
    %v125 = vld [vmem:[#allocation5 + $0x1f0] sm:$0xff]
    %v126 = vld [vmem:[#allocation5 + $0x1f8] sm:$0xff]
    %v127 = vld [vmem:[#allocation5 + $0x200] sm:$0xff]
    %v128 = vld [vmem:[#allocation5 + $0x208] sm:$0xff]
    %v129 = vld [vmem:[#allocation5 + $0x210] sm:$0xff]
    %v130 = vld [vmem:[#allocation5 + $0x218] sm:$0xff]
    %v131 = vld [vmem:[#allocation5 + $0x220] sm:$0xff]
    %v132 = vld [vmem:[#allocation5 + $0x228] sm:$0xff]
    %v133 = vld [vmem:[#allocation5 + $0x230] sm:$0xff]
    %v134 = vld [vmem:[#allocation5 + $0x238] sm:$0xff]
    %v135 = vld [vmem:[#allocation5 + $0x240] sm:$0xff]
    %v136 = vld [vmem:[#allocation5 + $0x248] sm:$0xff]
    %v137 = vld [vmem:[#allocation5 + $0x250] sm:$0xff]
    %v138 = vld [vmem:[#allocation5 + $0x258] sm:$0xff]
    %v139 = vld [vmem:[#allocation5 + $0x260] sm:$0xff]
    %v140 = vld [vmem:[#allocation5 + $0x268] sm:$0xff]
    %v141 = vld [vmem:[#allocation5 + $0x270] sm:$0xff]
    %v142 = vld [vmem:[#allocation5 + $0x278] sm:$0xff]
    %v143 = vld [vmem:[#allocation5 + $0x280] sm:$0xff]
    %v144 = vld [vmem:[#allocation5 + $0x288] sm:$0xff]
    %v145 = vld [vmem:[#allocation5 + $0x290] sm:$0xff]
    %v146 = vld [vmem:[#allocation5 + $0x298] sm:$0xff]
    %v147 = vld [vmem:[#allocation5 + $0x2a0] sm:$0xff]
    %v148 = vld [vmem:[#allocation5 + $0x2a8] sm:$0xff]
    %v149 = vld [vmem:[#allocation5 + $0x2b0] sm:$0xff]
    %v150 = vld [vmem:[#allocation5 + $0x2b8] sm:$0xff]
    %v151 = vld [vmem:[#allocation5 + $0x2c0] sm:$0xff]
    %v152 = vld [vmem:[#allocation5 + $0x2c8] sm:$0xff]
    %v153 = vld [vmem:[#allocation5 + $0x2d0] sm:$0xff]
    %v154 = vld [vmem:[#allocation5 + $0x2d8] sm:$0xff]
    %v155 = vld [vmem:[#allocation5 + $0x2e0] sm:$0xff]
    %v156 = vld [vmem:[#allocation5 + $0x2e8] sm:$0xff]
    %v157 = vld [vmem:[#allocation5 + $0x2f0] sm:$0xff]
    %v158 = vld [vmem:[#allocation5 + $0x2f8] sm:$0xff]
    %v159 = vld [vmem:[#allocation5 + $0x300] sm:$0xff]
    %v160 = vld [vmem:[#allocation5 + $0x308] sm:$0xff]
    %v161 = vld [vmem:[#allocation5 + $0x310] sm:$0xff]
    %v162 = vld [vmem:[#allocation5 + $0x318] sm:$0xff]
    %v163 = vld [vmem:[#allocation5 + $0x320] sm:$0xff]
    %v164 = vld [vmem:[#allocation5 + $0x328] sm:$0xff]
    %v165 = vld [vmem:[#allocation5 + $0x330] sm:$0xff]
    %v166 = vld [vmem:[#allocation5 + $0x338] sm:$0xff]
    %v167 = vld [vmem:[#allocation5 + $0x340] sm:$0xff]
    %v168 = vld [vmem:[#allocation5 + $0x348] sm:$0xff]
    %v169 = vld [vmem:[#allocation5 + $0x350] sm:$0xff]
    %v170 = vld [vmem:[#allocation5 + $0x358] sm:$0xff]
    %v171 = vld [vmem:[#allocation5 + $0x360] sm:$0xff]
    %v172 = vld [vmem:[#allocation5 + $0x368] sm:$0xff]
    %v173 = vld [vmem:[#allocation5 + $0x370] sm:$0xff]
    %v174 = vld [vmem:[#allocation5 + $0x378] sm:$0xff]
    %v175 = vld [vmem:[#allocation5 + $0x380] sm:$0xff]
    %v176 = vld [vmem:[#allocation5 + $0x388] sm:$0xff]
    %v177 = vld [vmem:[#allocation5 + $0x390] sm:$0xff]
    %v178 = vld [vmem:[#allocation5 + $0x398] sm:$0xff]
    %v179 = vld [vmem:[#allocation5 + $0x3a0] sm:$0xff]
    %v180 = vld [vmem:[#allocation5 + $0x3a8] sm:$0xff]
    %v181 = vld [vmem:[#allocation5 + $0x3b0] sm:$0xff]
    %v182 = vld [vmem:[#allocation5 + $0x3b8] sm:$0xff]
    %v183 = vld [vmem:[#allocation5 + $0x3c0] sm:$0xff]
    %v184 = vld [vmem:[#allocation5 + $0x3c8] sm:$0xff]
    %v185 = vld [vmem:[#allocation5 + $0x3d0] sm:$0xff]
    %v186 = vld [vmem:[#allocation5 + $0x3d8] sm:$0xff]
    %v187 = vld [vmem:[#allocation5 + $0x3e0] sm:$0xff]
    %v188 = vld [vmem:[#allocation5 + $0x3e8] sm:$0xff]
    %v189 = vld [vmem:[#allocation5 + $0x3f0] sm:$0xff]
    %v190 = vld [vmem:[#allocation5 + $0x3f8] sm:$0xff]
    %v191 = vld [vmem:[#allocation2] sm:$0xff]
    %v192 = vld [vmem:[#allocation2 + $0x8] sm:$0xff]
    %v193 = vld [vmem:[#allocation2 + $0x10] sm:$0xff]
    %v194 = vld [vmem:[#allocation2 + $0x18] sm:$0xff]
    %v195 = vld [vmem:[#allocation2 + $0x20] sm:$0xff]
    %v196 = vld [vmem:[#allocation2 + $0x28] sm:$0xff]
    %v197 = vld [vmem:[#allocation2 + $0x30] sm:$0xff]
    %v198 = vld [vmem:[#allocation2 + $0x38] sm:$0xff]
    %v207 = vcombine.low %v191, %v193
    %v208 = vcombine.high %v191, %v193
    %v209 = vcombine.low %v195, %v197
    %v210 = vcombine.high %v195, %v197
    %v212 = vunpack.c.l.s4 1983009808
    %v213 = vunpack.c.0.s8 %v212
    %v214 = vlaneseq
    %v215 = vshrl.u32 %v214, 7
    %v216 = vsub.s32 %v213, %v215
    %v217 = vrot.slane %v207, %v216
    %v219 = vunpack.c.l.s4 1983009808
    %v220 = vunpack.c.0.s8 %v219
    %v221 = vlaneseq
    %v222 = vshrl.u32 %v221, 7
    %v223 = vsub.s32 %v220, %v222
    %v224 = vrot.slane %v208, %v223
    %v226 = vunpack.c.l.s4 1983009808
    %v227 = vunpack.c.0.s8 %v226
    %v228 = vlaneseq
    %v229 = vshrl.u32 %v228, 7
    %v230 = vsub.s32 %v227, %v229
    %v231 = vrot.slane %v209, %v230
    %v233 = vunpack.c.l.s4 1983009808
    %v234 = vunpack.c.0.s8 %v233
    %v235 = vlaneseq
    %v236 = vshrl.u32 %v235, 7
    %v237 = vsub.s32 %v234, %v236
    %v238 = vrot.slane %v210, %v237
    %v239 = vcombine.low %v217, %v231
    %v240 = vcombine.high %v217, %v231
    %v241 = vcombine.low %v224, %v238
    %v242 = vcombine.high %v224, %v238
    %v243 = vcombine.low %v192, %v194
    %v244 = vcombine.high %v192, %v194
    %v245 = vcombine.low %v196, %v198
    %v246 = vcombine.high %v196, %v198
    %v248 = vunpack.c.l.s4 1983009808
    %v249 = vunpack.c.0.s8 %v248
    %v250 = vlaneseq
    %v251 = vshrl.u32 %v250, 7
    %v252 = vsub.s32 %v249, %v251
    %v253 = vrot.slane %v243, %v252
    %v255 = vunpack.c.l.s4 1983009808
    %v256 = vunpack.c.0.s8 %v255
    %v257 = vlaneseq
    %v258 = vshrl.u32 %v257, 7
    %v259 = vsub.s32 %v256, %v258
    %v260 = vrot.slane %v244, %v259
    %v262 = vunpack.c.l.s4 1983009808
    %v263 = vunpack.c.0.s8 %v262
    %v264 = vlaneseq
    %v265 = vshrl.u32 %v264, 7
    %v266 = vsub.s32 %v263, %v265
    %v267 = vrot.slane %v245, %v266
    %v269 = vunpack.c.l.s4 1983009808
    %v270 = vunpack.c.0.s8 %v269
    %v271 = vlaneseq
    %v272 = vshrl.u32 %v271, 7
    %v273 = vsub.s32 %v270, %v272
    %v274 = vrot.slane %v246, %v273
    %v275 = vcombine.low %v253, %v267
    %v276 = vcombine.high %v253, %v267
    %v277 = vcombine.low %v260, %v274
    %v278 = vcombine.high %v260, %v274
    %v287 = vpack.c.bf16 %v239, %v239
    %v288 = vpack.c.bf16 %v240, %v240
    %v289 = vpack.c.bf16 %v241, %v241
    %v290 = vpack.c.bf16 %v242, %v242
    %v291 = vpack.c.bf16 %v275, %v275
    %v292 = vpack.c.bf16 %v276, %v276
    %v293 = vpack.c.bf16 %v277, %v277
    %v294 = vpack.c.bf16 %v278, %v278
    %v295 = vld [vmem:[%s2] sm:$0x3]
    %v297 = vlaneseq
    %v298 = vshrl.u32 %v297, 7
    %v299 = vsub.s32 0, %v298
    %v300 = vrot.slane %v295, %v299
    %v301 = vlaneseq
    %v302 = vshrl.u32 %v301, 7
    %v303 = vsub.s32 1, %v302
    %v304 = vrot.slane %v295, %v303
    %v435 = vunpack.c.l.b16 %v63
    %v436 = vunpack.c.h.b16 %v63
    %v437 = vunpack.c.l.b16 %v64
    %v438 = vunpack.c.h.b16 %v64
    %v439 = vunpack.c.l.b16 %v65
    %v440 = vunpack.c.h.b16 %v65
    %v441 = vunpack.c.l.b16 %v66
    %v442 = vunpack.c.h.b16 %v66
    %v443 = vunpack.c.l.b16 %v67
    %v444 = vunpack.c.h.b16 %v67
    %v445 = vunpack.c.l.b16 %v68
    %v446 = vunpack.c.h.b16 %v68
    %v447 = vunpack.c.l.b16 %v69
    %v448 = vunpack.c.h.b16 %v69
    %v449 = vunpack.c.l.b16 %v70
    %v450 = vunpack.c.h.b16 %v70
    %v451 = vunpack.c.l.b16 %v71
    %v452 = vunpack.c.h.b16 %v71
    %v453 = vunpack.c.l.b16 %v72
    %v454 = vunpack.c.h.b16 %v72
    %v455 = vunpack.c.l.b16 %v73
    %v456 = vunpack.c.h.b16 %v73
    %v457 = vunpack.c.l.b16 %v74
    %v458 = vunpack.c.h.b16 %v74
    %v459 = vunpack.c.l.b16 %v75
    %v460 = vunpack.c.h.b16 %v75
    %v461 = vunpack.c.l.b16 %v76
    %v462 = vunpack.c.h.b16 %v76
    %v463 = vunpack.c.l.b16 %v77
    %v464 = vunpack.c.h.b16 %v77
    %v465 = vunpack.c.l.b16 %v78
    %v466 = vunpack.c.h.b16 %v78
    %v467 = vunpack.c.l.b16 %v79
    %v468 = vunpack.c.h.b16 %v79
    %v469 = vunpack.c.l.b16 %v80
    %v470 = vunpack.c.h.b16 %v80
    %v471 = vunpack.c.l.b16 %v81
    %v472 = vunpack.c.h.b16 %v81
    %v473 = vunpack.c.l.b16 %v82
    %v474 = vunpack.c.h.b16 %v82
    %v475 = vunpack.c.l.b16 %v83
    %v476 = vunpack.c.h.b16 %v83
    %v477 = vunpack.c.l.b16 %v84
    %v478 = vunpack.c.h.b16 %v84
    %v479 = vunpack.c.l.b16 %v85
    %v480 = vunpack.c.h.b16 %v85
    %v481 = vunpack.c.l.b16 %v86
    %v482 = vunpack.c.h.b16 %v86
    %v483 = vunpack.c.l.b16 %v87
    %v484 = vunpack.c.h.b16 %v87
    %v485 = vunpack.c.l.b16 %v88
    %v486 = vunpack.c.h.b16 %v88
    %v487 = vunpack.c.l.b16 %v89
    %v488 = vunpack.c.h.b16 %v89
    %v489 = vunpack.c.l.b16 %v90
    %v490 = vunpack.c.h.b16 %v90
    %v491 = vunpack.c.l.b16 %v91
    %v492 = vunpack.c.h.b16 %v91
    %v493 = vunpack.c.l.b16 %v92
    %v494 = vunpack.c.h.b16 %v92
    %v495 = vunpack.c.l.b16 %v93
    %v496 = vunpack.c.h.b16 %v93
    %v497 = vunpack.c.l.b16 %v94
    %v498 = vunpack.c.h.b16 %v94
    %v499 = vunpack.c.l.b16 %v95
    %v500 = vunpack.c.h.b16 %v95
    %v501 = vunpack.c.l.b16 %v96
    %v502 = vunpack.c.h.b16 %v96
    %v503 = vunpack.c.l.b16 %v97
    %v504 = vunpack.c.h.b16 %v97
    %v505 = vunpack.c.l.b16 %v98
    %v506 = vunpack.c.h.b16 %v98
    %v507 = vunpack.c.l.b16 %v99
    %v508 = vunpack.c.h.b16 %v99
    %v509 = vunpack.c.l.b16 %v100
    %v510 = vunpack.c.h.b16 %v100
    %v511 = vunpack.c.l.b16 %v101
    %v512 = vunpack.c.h.b16 %v101
    %v513 = vunpack.c.l.b16 %v102
    %v514 = vunpack.c.h.b16 %v102
    %v515 = vunpack.c.l.b16 %v103
    %v516 = vunpack.c.h.b16 %v103
    %v517 = vunpack.c.l.b16 %v104
    %v518 = vunpack.c.h.b16 %v104
    %v519 = vunpack.c.l.b16 %v105
    %v520 = vunpack.c.h.b16 %v105
    %v521 = vunpack.c.l.b16 %v106
    %v522 = vunpack.c.h.b16 %v106
    %v523 = vunpack.c.l.b16 %v107
    %v524 = vunpack.c.h.b16 %v107
    %v525 = vunpack.c.l.b16 %v108
    %v526 = vunpack.c.h.b16 %v108
    %v527 = vunpack.c.l.b16 %v109
    %v528 = vunpack.c.h.b16 %v109
    %v529 = vunpack.c.l.b16 %v110
    %v530 = vunpack.c.h.b16 %v110
    %v531 = vunpack.c.l.b16 %v111
    %v532 = vunpack.c.h.b16 %v111
    %v533 = vunpack.c.l.b16 %v112
    %v534 = vunpack.c.h.b16 %v112
    %v535 = vunpack.c.l.b16 %v113
    %v536 = vunpack.c.h.b16 %v113
    %v537 = vunpack.c.l.b16 %v114
    %v538 = vunpack.c.h.b16 %v114
    %v539 = vunpack.c.l.b16 %v115
    %v540 = vunpack.c.h.b16 %v115
    %v541 = vunpack.c.l.b16 %v116
    %v542 = vunpack.c.h.b16 %v116
    %v543 = vunpack.c.l.b16 %v117
    %v544 = vunpack.c.h.b16 %v117
    %v545 = vunpack.c.l.b16 %v118
    %v546 = vunpack.c.h.b16 %v118
    %v547 = vunpack.c.l.b16 %v119
    %v548 = vunpack.c.h.b16 %v119
    %v549 = vunpack.c.l.b16 %v120
    %v550 = vunpack.c.h.b16 %v120
    %v551 = vunpack.c.l.b16 %v121
    %v552 = vunpack.c.h.b16 %v121
    %v553 = vunpack.c.l.b16 %v122
    %v554 = vunpack.c.h.b16 %v122
    %v555 = vunpack.c.l.b16 %v123
    %v556 = vunpack.c.h.b16 %v123
    %v557 = vunpack.c.l.b16 %v124
    %v558 = vunpack.c.h.b16 %v124
    %v559 = vunpack.c.l.b16 %v125
    %v560 = vunpack.c.h.b16 %v125
    %v561 = vunpack.c.l.b16 %v126
    %v562 = vunpack.c.h.b16 %v126
    %v563 = vunpack.c.l.b16 %v127
    %v564 = vunpack.c.h.b16 %v127
    %v565 = vunpack.c.l.b16 %v128
    %v566 = vunpack.c.h.b16 %v128
    %v567 = vunpack.c.l.b16 %v129
    %v568 = vunpack.c.h.b16 %v129
    %v569 = vunpack.c.l.b16 %v130
    %v570 = vunpack.c.h.b16 %v130
    %v571 = vunpack.c.l.b16 %v131
    %v572 = vunpack.c.h.b16 %v131
    %v573 = vunpack.c.l.b16 %v132
    %v574 = vunpack.c.h.b16 %v132
    %v575 = vunpack.c.l.b16 %v133
    %v576 = vunpack.c.h.b16 %v133
    %v577 = vunpack.c.l.b16 %v134
    %v578 = vunpack.c.h.b16 %v134
    %v579 = vunpack.c.l.b16 %v135
    %v580 = vunpack.c.h.b16 %v135
    %v581 = vunpack.c.l.b16 %v136
    %v582 = vunpack.c.h.b16 %v136
    %v583 = vunpack.c.l.b16 %v137
    %v584 = vunpack.c.h.b16 %v137
    %v585 = vunpack.c.l.b16 %v138
    %v586 = vunpack.c.h.b16 %v138
    %v587 = vunpack.c.l.b16 %v139
    %v588 = vunpack.c.h.b16 %v139
    %v589 = vunpack.c.l.b16 %v140
    %v590 = vunpack.c.h.b16 %v140
    %v591 = vunpack.c.l.b16 %v141
    %v592 = vunpack.c.h.b16 %v141
    %v593 = vunpack.c.l.b16 %v142
    %v594 = vunpack.c.h.b16 %v142
    %v595 = vunpack.c.l.b16 %v143
    %v596 = vunpack.c.h.b16 %v143
    %v597 = vunpack.c.l.b16 %v144
    %v598 = vunpack.c.h.b16 %v144
    %v599 = vunpack.c.l.b16 %v145
    %v600 = vunpack.c.h.b16 %v145
    %v601 = vunpack.c.l.b16 %v146
    %v602 = vunpack.c.h.b16 %v146
    %v603 = vunpack.c.l.b16 %v147
    %v604 = vunpack.c.h.b16 %v147
    %v605 = vunpack.c.l.b16 %v148
    %v606 = vunpack.c.h.b16 %v148
    %v607 = vunpack.c.l.b16 %v149
    %v608 = vunpack.c.h.b16 %v149
    %v609 = vunpack.c.l.b16 %v150
    %v610 = vunpack.c.h.b16 %v150
    %v611 = vunpack.c.l.b16 %v151
    %v612 = vunpack.c.h.b16 %v151
    %v613 = vunpack.c.l.b16 %v152
    %v614 = vunpack.c.h.b16 %v152
    %v615 = vunpack.c.l.b16 %v153
    %v616 = vunpack.c.h.b16 %v153
    %v617 = vunpack.c.l.b16 %v154
    %v618 = vunpack.c.h.b16 %v154
    %v619 = vunpack.c.l.b16 %v155
    %v620 = vunpack.c.h.b16 %v155
    %v621 = vunpack.c.l.b16 %v156
    %v622 = vunpack.c.h.b16 %v156
    %v623 = vunpack.c.l.b16 %v157
    %v624 = vunpack.c.h.b16 %v157
    %v625 = vunpack.c.l.b16 %v158
    %v626 = vunpack.c.h.b16 %v158
    %v627 = vunpack.c.l.b16 %v159
    %v628 = vunpack.c.h.b16 %v159
    %v629 = vunpack.c.l.b16 %v160
    %v630 = vunpack.c.h.b16 %v160
    %v631 = vunpack.c.l.b16 %v161
    %v632 = vunpack.c.h.b16 %v161
    %v633 = vunpack.c.l.b16 %v162
    %v634 = vunpack.c.h.b16 %v162
    %v635 = vunpack.c.l.b16 %v163
    %v636 = vunpack.c.h.b16 %v163
    %v637 = vunpack.c.l.b16 %v164
    %v638 = vunpack.c.h.b16 %v164
    %v639 = vunpack.c.l.b16 %v165
    %v640 = vunpack.c.h.b16 %v165
    %v641 = vunpack.c.l.b16 %v166
    %v642 = vunpack.c.h.b16 %v166
    %v643 = vunpack.c.l.b16 %v167
    %v644 = vunpack.c.h.b16 %v167
    %v645 = vunpack.c.l.b16 %v168
    %v646 = vunpack.c.h.b16 %v168
    %v647 = vunpack.c.l.b16 %v169
    %v648 = vunpack.c.h.b16 %v169
    %v649 = vunpack.c.l.b16 %v170
    %v650 = vunpack.c.h.b16 %v170
    %v651 = vunpack.c.l.b16 %v171
    %v652 = vunpack.c.h.b16 %v171
    %v653 = vunpack.c.l.b16 %v172
    %v654 = vunpack.c.h.b16 %v172
    %v655 = vunpack.c.l.b16 %v173
    %v656 = vunpack.c.h.b16 %v173
    %v657 = vunpack.c.l.b16 %v174
    %v658 = vunpack.c.h.b16 %v174
    %v659 = vunpack.c.l.b16 %v175
    %v660 = vunpack.c.h.b16 %v175
    %v661 = vunpack.c.l.b16 %v176
    %v662 = vunpack.c.h.b16 %v176
    %v663 = vunpack.c.l.b16 %v177
    %v664 = vunpack.c.h.b16 %v177
    %v665 = vunpack.c.l.b16 %v178
    %v666 = vunpack.c.h.b16 %v178
    %v667 = vunpack.c.l.b16 %v179
    %v668 = vunpack.c.h.b16 %v179
    %v669 = vunpack.c.l.b16 %v180
    %v670 = vunpack.c.h.b16 %v180
    %v671 = vunpack.c.l.b16 %v181
    %v672 = vunpack.c.h.b16 %v181
    %v673 = vunpack.c.l.b16 %v182
    %v674 = vunpack.c.h.b16 %v182
    %v675 = vunpack.c.l.b16 %v183
    %v676 = vunpack.c.h.b16 %v183
    %v677 = vunpack.c.l.b16 %v184
    %v678 = vunpack.c.h.b16 %v184
    %v679 = vunpack.c.l.b16 %v185
    %v680 = vunpack.c.h.b16 %v185
    %v681 = vunpack.c.l.b16 %v186
    %v682 = vunpack.c.h.b16 %v186
    %v683 = vunpack.c.l.b16 %v187
    %v684 = vunpack.c.h.b16 %v187
    %v685 = vunpack.c.l.b16 %v188
    %v686 = vunpack.c.h.b16 %v188
    %v687 = vunpack.c.l.b16 %v189
    %v688 = vunpack.c.h.b16 %v189
    %v689 = vunpack.c.l.b16 %v190
    %v690 = vunpack.c.h.b16 %v190
    %v691 = vpack.c.b16 %v437, %v435
    %v692 = vpack.c.b16 %v438, %v436
    %v693 = vpack.c.b16 %v441, %v439
    %v694 = vpack.c.b16 %v442, %v440
    %v695 = vpack.c.b16 %v445, %v443
    %v696 = vpack.c.b16 %v446, %v444
    %v697 = vpack.c.b16 %v449, %v447
    %v698 = vpack.c.b16 %v450, %v448
    %v699 = vpack.c.b16 %v453, %v451
    %v700 = vpack.c.b16 %v454, %v452
    %v701 = vpack.c.b16 %v457, %v455
    %v702 = vpack.c.b16 %v458, %v456
    %v703 = vpack.c.b16 %v461, %v459
    %v704 = vpack.c.b16 %v462, %v460
    %v705 = vpack.c.b16 %v465, %v463
    %v706 = vpack.c.b16 %v466, %v464
    %v707 = vpack.c.b16 %v469, %v467
    %v708 = vpack.c.b16 %v470, %v468
    %v709 = vpack.c.b16 %v473, %v471
    %v710 = vpack.c.b16 %v474, %v472
    %v711 = vpack.c.b16 %v477, %v475
    %v712 = vpack.c.b16 %v478, %v476
    %v713 = vpack.c.b16 %v481, %v479
    %v714 = vpack.c.b16 %v482, %v480
    %v715 = vpack.c.b16 %v485, %v483
    %v716 = vpack.c.b16 %v486, %v484
    %v717 = vpack.c.b16 %v489, %v487
    %v718 = vpack.c.b16 %v490, %v488
    %v719 = vpack.c.b16 %v493, %v491
    %v720 = vpack.c.b16 %v494, %v492
    %v721 = vpack.c.b16 %v497, %v495
    %v722 = vpack.c.b16 %v498, %v496
    %v723 = vpack.c.b16 %v501, %v499
    %v724 = vpack.c.b16 %v502, %v500
    %v725 = vpack.c.b16 %v505, %v503
    %v726 = vpack.c.b16 %v506, %v504
    %v727 = vpack.c.b16 %v509, %v507
    %v728 = vpack.c.b16 %v510, %v508
    %v729 = vpack.c.b16 %v513, %v511
    %v730 = vpack.c.b16 %v514, %v512
    %v731 = vpack.c.b16 %v517, %v515
    %v732 = vpack.c.b16 %v518, %v516
    %v733 = vpack.c.b16 %v521, %v519
    %v734 = vpack.c.b16 %v522, %v520
    %v735 = vpack.c.b16 %v525, %v523
    %v736 = vpack.c.b16 %v526, %v524
    %v737 = vpack.c.b16 %v529, %v527
    %v738 = vpack.c.b16 %v530, %v528
    %v739 = vpack.c.b16 %v533, %v531
    %v740 = vpack.c.b16 %v534, %v532
    %v741 = vpack.c.b16 %v537, %v535
    %v742 = vpack.c.b16 %v538, %v536
    %v743 = vpack.c.b16 %v541, %v539
    %v744 = vpack.c.b16 %v542, %v540
    %v745 = vpack.c.b16 %v545, %v543
    %v746 = vpack.c.b16 %v546, %v544
    %v747 = vpack.c.b16 %v549, %v547
    %v748 = vpack.c.b16 %v550, %v548
    %v749 = vpack.c.b16 %v553, %v551
    %v750 = vpack.c.b16 %v554, %v552
    %v751 = vpack.c.b16 %v557, %v555
    %v752 = vpack.c.b16 %v558, %v556
    %v753 = vpack.c.b16 %v561, %v559
    %v754 = vpack.c.b16 %v562, %v560
    %v755 = vpack.c.b16 %v565, %v563
    %v756 = vpack.c.b16 %v566, %v564
    %v757 = vpack.c.b16 %v569, %v567
    %v758 = vpack.c.b16 %v570, %v568
    %v759 = vpack.c.b16 %v573, %v571
    %v760 = vpack.c.b16 %v574, %v572
    %v761 = vpack.c.b16 %v577, %v575
    %v762 = vpack.c.b16 %v578, %v576
    %v763 = vpack.c.b16 %v581, %v579
    %v764 = vpack.c.b16 %v582, %v580
    %v765 = vpack.c.b16 %v585, %v583
    %v766 = vpack.c.b16 %v586, %v584
    %v767 = vpack.c.b16 %v589, %v587
    %v768 = vpack.c.b16 %v590, %v588
    %v769 = vpack.c.b16 %v593, %v591
    %v770 = vpack.c.b16 %v594, %v592
    %v771 = vpack.c.b16 %v597, %v595
    %v772 = vpack.c.b16 %v598, %v596
    %v773 = vpack.c.b16 %v601, %v599
    %v774 = vpack.c.b16 %v602, %v600
    %v775 = vpack.c.b16 %v605, %v603
    %v776 = vpack.c.b16 %v606, %v604
    %v777 = vpack.c.b16 %v609, %v607
    %v778 = vpack.c.b16 %v610, %v608
    %v779 = vpack.c.b16 %v613, %v611
    %v780 = vpack.c.b16 %v614, %v612
    %v781 = vpack.c.b16 %v617, %v615
    %v782 = vpack.c.b16 %v618, %v616
    %v783 = vpack.c.b16 %v621, %v619
    %v784 = vpack.c.b16 %v622, %v620
    %v785 = vpack.c.b16 %v625, %v623
    %v786 = vpack.c.b16 %v626, %v624
    %v787 = vpack.c.b16 %v629, %v627
    %v788 = vpack.c.b16 %v630, %v628
    %v789 = vpack.c.b16 %v633, %v631
    %v790 = vpack.c.b16 %v634, %v632
    %v791 = vpack.c.b16 %v637, %v635
    %v792 = vpack.c.b16 %v638, %v636
    %v793 = vpack.c.b16 %v641, %v639
    %v794 = vpack.c.b16 %v642, %v640
    %v795 = vpack.c.b16 %v645, %v643
    %v796 = vpack.c.b16 %v646, %v644
    %v797 = vpack.c.b16 %v649, %v647
    %v798 = vpack.c.b16 %v650, %v648
    %v799 = vpack.c.b16 %v653, %v651
    %v800 = vpack.c.b16 %v654, %v652
    %v801 = vpack.c.b16 %v657, %v655
    %v802 = vpack.c.b16 %v658, %v656
    %v803 = vpack.c.b16 %v661, %v659
    %v804 = vpack.c.b16 %v662, %v660
    %v805 = vpack.c.b16 %v665, %v663
    %v806 = vpack.c.b16 %v666, %v664
    %v807 = vpack.c.b16 %v669, %v667
    %v808 = vpack.c.b16 %v670, %v668
    %v809 = vpack.c.b16 %v673, %v671
    %v810 = vpack.c.b16 %v674, %v672
    %v811 = vpack.c.b16 %v677, %v675
    %v812 = vpack.c.b16 %v678, %v676
    %v813 = vpack.c.b16 %v681, %v679
    %v814 = vpack.c.b16 %v682, %v680
    %v815 = vpack.c.b16 %v685, %v683
    %v816 = vpack.c.b16 %v686, %v684
    %v817 = vpack.c.b16 %v689, %v687
    %v818 = vpack.c.b16 %v690, %v688
    %947 = vmatprep.subr.bf16.mxu0 %v706
    %948 = vmatpush1.bf16.msra.mxu0 %v705
    %949 = vmatprep.subr.bf16.mxu0 %v704
    %950 = vmatpush1.bf16.msra.mxu0 %v703
    %951 = vmatprep.subr.bf16.mxu0 %v702
    %952 = vmatpush1.bf16.msra.mxu0 %v701
    %953 = vmatprep.subr.bf16.mxu0 %v700
    %954 = vmatpush1.bf16.msra.mxu0 %v699
    %955 = vmatprep.subr.bf16.mxu0 %v698
    %956 = vmatpush1.bf16.msra.mxu0 %v697
    %957 = vmatprep.subr.bf16.mxu0 %v696
    %958 = vmatpush1.bf16.msra.mxu0 %v695
    %959 = vmatprep.subr.bf16.mxu0 %v694
    %960 = vmatpush1.bf16.msra.mxu0 %v693
    %961 = vmatprep.subr.bf16.mxu0 %v692
    %962 = vmatpush1.bf16.msra.mxu0 %v691
    %963 = vmatprep.subr.bf16.mxu0 %v722
    %964 = vmatpush2.bf16.msra.mxu0 %v721
    %965 = vmatprep.subr.bf16.mxu0 %v720
    %966 = vmatpush2.bf16.msra.mxu0 %v719
    %967 = vmatprep.subr.bf16.mxu0 %v718
    %968 = vmatpush2.bf16.msra.mxu0 %v717
    %969 = vmatprep.subr.bf16.mxu0 %v716
    %970 = vmatpush2.bf16.msra.mxu0 %v715
    %971 = vmatprep.subr.bf16.mxu0 %v714
    %972 = vmatpush2.bf16.msra.mxu0 %v713
    %973 = vmatprep.subr.bf16.mxu0 %v712
    %974 = vmatpush2.bf16.msra.mxu0 %v711
    %975 = vmatprep.subr.bf16.mxu0 %v710
    %976 = vmatpush2.bf16.msra.mxu0 %v709
    %977 = vmatprep.subr.bf16.mxu0 %v708
    %978 = vmatpush2.bf16.msra.mxu0 %v707
    %979 = vmatprep.mubr.bf16.mxu0 %v288
    %980 = vmatmul.mubr.bf16.gmra.mxu0 %v287
    %v981 = vpop.f32.mrf.mxu0
    %v982 = vadd.f32 %v300, %v981
    %v983 = vpop.f32.mrf.mxu0
    %v984 = vadd.f32 %v304, %v983
    %v985 = vpop.f32.mrf.mxu0
    %v986 = vpop.f32.mrf.mxu0
    %987 = vdwg.mxu0
    %988 = vmatprep.subr.bf16.mxu0 %v738
    %989 = vmatpush1.bf16.msra.mxu0 %v737
    %990 = vmatprep.subr.bf16.mxu0 %v736
    %991 = vmatpush1.bf16.msra.mxu0 %v735
    %992 = vmatprep.subr.bf16.mxu0 %v734
    %993 = vmatpush1.bf16.msra.mxu0 %v733
    %994 = vmatprep.subr.bf16.mxu0 %v732
    %995 = vmatpush1.bf16.msra.mxu0 %v731
    %996 = vmatprep.subr.bf16.mxu0 %v730
    %997 = vmatpush1.bf16.msra.mxu0 %v729
    %998 = vmatprep.subr.bf16.mxu0 %v728
    %999 = vmatpush1.bf16.msra.mxu0 %v727
    %1000 = vmatprep.subr.bf16.mxu0 %v726
    %1001 = vmatpush1.bf16.msra.mxu0 %v725
    %1002 = vmatprep.subr.bf16.mxu0 %v724
    %1003 = vmatpush1.bf16.msra.mxu0 %v723
    %1004 = vmatprep.subr.bf16.mxu0 %v754
    %1005 = vmatpush2.bf16.msra.mxu0 %v753
    %1006 = vmatprep.subr.bf16.mxu0 %v752
    %1007 = vmatpush2.bf16.msra.mxu0 %v751
    %1008 = vmatprep.subr.bf16.mxu0 %v750
    %1009 = vmatpush2.bf16.msra.mxu0 %v749
    %1010 = vmatprep.subr.bf16.mxu0 %v748
    %1011 = vmatpush2.bf16.msra.mxu0 %v747
    %1012 = vmatprep.subr.bf16.mxu0 %v746
    %1013 = vmatpush2.bf16.msra.mxu0 %v745
    %1014 = vmatprep.subr.bf16.mxu0 %v744
    %1015 = vmatpush2.bf16.msra.mxu0 %v743
    %1016 = vmatprep.subr.bf16.mxu0 %v742
    %1017 = vmatpush2.bf16.msra.mxu0 %v741
    %1018 = vmatprep.subr.bf16.mxu0 %v740
    %1019 = vmatpush2.bf16.msra.mxu0 %v739
    %1020 = vmatprep.mubr.bf16.mxu0 %v290
    %1021 = vmatmul.mubr.bf16.gmra.mxu0 %v289
    %v1022 = vpop.f32.mrf.mxu0
    %v1023 = vadd.f32 %v982, %v1022
    %v1024 = vpop.f32.mrf.mxu0
    %v1025 = vadd.f32 %v984, %v1024
    %v1026 = vpop.f32.mrf.mxu0
    %v1027 = vpop.f32.mrf.mxu0
    %1028 = vdwg.mxu0
    %1029 = vmatprep.subr.bf16.mxu0 %v770
    %1030 = vmatpush1.bf16.msra.mxu0 %v769
    %1031 = vmatprep.subr.bf16.mxu0 %v768
    %1032 = vmatpush1.bf16.msra.mxu0 %v767
    %1033 = vmatprep.subr.bf16.mxu0 %v766
    %1034 = vmatpush1.bf16.msra.mxu0 %v765
    %1035 = vmatprep.subr.bf16.mxu0 %v764
    %1036 = vmatpush1.bf16.msra.mxu0 %v763
    %1037 = vmatprep.subr.bf16.mxu0 %v762
    %1038 = vmatpush1.bf16.msra.mxu0 %v761
    %1039 = vmatprep.subr.bf16.mxu0 %v760
    %1040 = vmatpush1.bf16.msra.mxu0 %v759
    %1041 = vmatprep.subr.bf16.mxu0 %v758
    %1042 = vmatpush1.bf16.msra.mxu0 %v757
    %1043 = vmatprep.subr.bf16.mxu0 %v756
    %1044 = vmatpush1.bf16.msra.mxu0 %v755
    %1045 = vmatprep.subr.bf16.mxu0 %v786
    %1046 = vmatpush2.bf16.msra.mxu0 %v785
    %1047 = vmatprep.subr.bf16.mxu0 %v784
    %1048 = vmatpush2.bf16.msra.mxu0 %v783
    %1049 = vmatprep.subr.bf16.mxu0 %v782
    %1050 = vmatpush2.bf16.msra.mxu0 %v781
    %1051 = vmatprep.subr.bf16.mxu0 %v780
    %1052 = vmatpush2.bf16.msra.mxu0 %v779
    %1053 = vmatprep.subr.bf16.mxu0 %v778
    %1054 = vmatpush2.bf16.msra.mxu0 %v777
    %1055 = vmatprep.subr.bf16.mxu0 %v776
    %1056 = vmatpush2.bf16.msra.mxu0 %v775
    %1057 = vmatprep.subr.bf16.mxu0 %v774
    %1058 = vmatpush2.bf16.msra.mxu0 %v773
    %1059 = vmatprep.subr.bf16.mxu0 %v772
    %1060 = vmatpush2.bf16.msra.mxu0 %v771
    %1061 = vmatprep.mubr.bf16.mxu0 %v292
    %1062 = vmatmul.mubr.bf16.gmra.mxu0 %v291
    %v1063 = vpop.f32.mrf.mxu0
    %v1064 = vadd.f32 %v1023, %v1063
    %v1065 = vpop.f32.mrf.mxu0
    %v1066 = vadd.f32 %v1025, %v1065
    %v1067 = vpop.f32.mrf.mxu0
    %v1068 = vpop.f32.mrf.mxu0
    %1069 = vdwg.mxu0
    %1070 = vmatprep.subr.bf16.mxu0 %v802
    %1071 = vmatpush1.bf16.msra.mxu0 %v801
    %1072 = vmatprep.subr.bf16.mxu0 %v800
    %1073 = vmatpush1.bf16.msra.mxu0 %v799
    %1074 = vmatprep.subr.bf16.mxu0 %v798
    %1075 = vmatpush1.bf16.msra.mxu0 %v797
    %1076 = vmatprep.subr.bf16.mxu0 %v796
    %1077 = vmatpush1.bf16.msra.mxu0 %v795
    %1078 = vmatprep.subr.bf16.mxu0 %v794
    %1079 = vmatpush1.bf16.msra.mxu0 %v793
    %1080 = vmatprep.subr.bf16.mxu0 %v792
    %1081 = vmatpush1.bf16.msra.mxu0 %v791
    %1082 = vmatprep.subr.bf16.mxu0 %v790
    %1083 = vmatpush1.bf16.msra.mxu0 %v789
    %1084 = vmatprep.subr.bf16.mxu0 %v788
    %1085 = vmatpush1.bf16.msra.mxu0 %v787
    %1086 = vmatprep.subr.bf16.mxu0 %v818
    %1087 = vmatpush2.bf16.msra.mxu0 %v817
    %1088 = vmatprep.subr.bf16.mxu0 %v816
    %1089 = vmatpush2.bf16.msra.mxu0 %v815
    %1090 = vmatprep.subr.bf16.mxu0 %v814
    %1091 = vmatpush2.bf16.msra.mxu0 %v813
    %1092 = vmatprep.subr.bf16.mxu0 %v812
    %1093 = vmatpush2.bf16.msra.mxu0 %v811
    %1094 = vmatprep.subr.bf16.mxu0 %v810
    %1095 = vmatpush2.bf16.msra.mxu0 %v809
    %1096 = vmatprep.subr.bf16.mxu0 %v808
    %1097 = vmatpush2.bf16.msra.mxu0 %v807
    %1098 = vmatprep.subr.bf16.mxu0 %v806
    %1099 = vmatpush2.bf16.msra.mxu0 %v805
    %1100 = vmatprep.subr.bf16.mxu0 %v804
    %1101 = vmatpush2.bf16.msra.mxu0 %v803
    %1102 = vmatprep.mubr.bf16.mxu0 %v294
    %1103 = vmatmul.mubr.bf16.gmra.mxu0 %v293
    %v1104 = vpop.f32.mrf.mxu0
    %v1105 = vadd.f32 %v1064, %v1104
    %v1106 = vpop.f32.mrf.mxu0
    %v1107 = vadd.f32 %v1066, %v1106
    %v1108 = vpop.f32.mrf.mxu0
    %v1109 = vpop.f32.mrf.mxu0
    %1110 = vdwg.mxu0
    %vm1111 = vcmp.ge.f32.partialorder %v1105, 0.0
    %vm1112 = vcmp.ge.f32.partialorder %v1107, 0.0
    %v1113 = vmul.f32 %v1105, 0.01
    %v1114 = vmul.f32 %v1107, 0.01
    %v1115 = vsel %vm1111, %v1105, %v1113
    %v1116 = vsel %vm1112, %v1107, %v1114
    %v1117 = vld [vmem:[#allocation7] sm:$0xf]
    %v1118 = vld [vmem:[#allocation7 + $0x4] sm:$0xf]
    %v1119 = vld [vmem:[#allocation7 + $0x8] sm:$0xf]
    %v1120 = vld [vmem:[#allocation7 + $0xc] sm:$0xf]
    %v1121 = vld [vmem:[#allocation7 + $0x10] sm:$0xf]
    %v1122 = vld [vmem:[#allocation7 + $0x14] sm:$0xf]
    %v1123 = vld [vmem:[#allocation7 + $0x18] sm:$0xf]
    %v1124 = vld [vmem:[#allocation7 + $0x1c] sm:$0xf]
    %v1125 = vld [vmem:[#allocation7 + $0x20] sm:$0xf]
    %v1126 = vld [vmem:[#allocation7 + $0x24] sm:$0xf]
    %v1127 = vld [vmem:[#allocation7 + $0x28] sm:$0xf]
    %v1128 = vld [vmem:[#allocation7 + $0x2c] sm:$0xf]
    %v1129 = vld [vmem:[#allocation7 + $0x30] sm:$0xf]
    %v1130 = vld [vmem:[#allocation7 + $0x34] sm:$0xf]
    %v1131 = vld [vmem:[#allocation7 + $0x38] sm:$0xf]
    %v1132 = vld [vmem:[#allocation7 + $0x3c] sm:$0xf]
    %v1133 = vld [vmem:[#allocation7 + $0x40] sm:$0xf]
    %v1134 = vld [vmem:[#allocation7 + $0x44] sm:$0xf]
    %v1135 = vld [vmem:[#allocation7 + $0x48] sm:$0xf]
    %v1136 = vld [vmem:[#allocation7 + $0x4c] sm:$0xf]
    %v1137 = vld [vmem:[#allocation7 + $0x50] sm:$0xf]
    %v1138 = vld [vmem:[#allocation7 + $0x54] sm:$0xf]
    %v1139 = vld [vmem:[#allocation7 + $0x58] sm:$0xf]
    %v1140 = vld [vmem:[#allocation7 + $0x5c] sm:$0xf]
    %v1141 = vld [vmem:[#allocation7 + $0x60] sm:$0xf]
    %v1142 = vld [vmem:[#allocation7 + $0x64] sm:$0xf]
    %v1143 = vld [vmem:[#allocation7 + $0x68] sm:$0xf]
    %v1144 = vld [vmem:[#allocation7 + $0x6c] sm:$0xf]
    %v1145 = vld [vmem:[#allocation7 + $0x70] sm:$0xf]
    %v1146 = vld [vmem:[#allocation7 + $0x74] sm:$0xf]
    %v1147 = vld [vmem:[#allocation7 + $0x78] sm:$0xf]
    %v1148 = vld [vmem:[#allocation7 + $0x7c] sm:$0xf]
    %v1149 = vpack.c.bf16 %v1115, %v1115
    %v1150 = vpack.c.bf16 %v1116, %v1116
    %v1151 = vld [vmem:[%s4] sm:$0x1]
    %v1153 = vlaneseq
    %v1154 = vshrl.u32 %v1153, 7
    %v1155 = vsub.s32 0, %v1154
    %v1156 = vrot.slane %v1151, %v1155
    %v1190 = vunpack.c.l.b16 %v1117
    %v1191 = vunpack.c.l.b16 %v1118
    %v1192 = vunpack.c.l.b16 %v1119
    %v1193 = vunpack.c.l.b16 %v1120
    %v1194 = vunpack.c.l.b16 %v1121
    %v1195 = vunpack.c.l.b16 %v1122
    %v1196 = vunpack.c.l.b16 %v1123
    %v1197 = vunpack.c.l.b16 %v1124
    %v1198 = vunpack.c.l.b16 %v1125
    %v1199 = vunpack.c.l.b16 %v1126
    %v1200 = vunpack.c.l.b16 %v1127
    %v1201 = vunpack.c.l.b16 %v1128
    %v1202 = vunpack.c.l.b16 %v1129
    %v1203 = vunpack.c.l.b16 %v1130
    %v1204 = vunpack.c.l.b16 %v1131
    %v1205 = vunpack.c.l.b16 %v1132
    %v1206 = vunpack.c.l.b16 %v1133
    %v1207 = vunpack.c.l.b16 %v1134
    %v1208 = vunpack.c.l.b16 %v1135
    %v1209 = vunpack.c.l.b16 %v1136
    %v1210 = vunpack.c.l.b16 %v1137
    %v1211 = vunpack.c.l.b16 %v1138
    %v1212 = vunpack.c.l.b16 %v1139
    %v1213 = vunpack.c.l.b16 %v1140
    %v1214 = vunpack.c.l.b16 %v1141
    %v1215 = vunpack.c.l.b16 %v1142
    %v1216 = vunpack.c.l.b16 %v1143
    %v1217 = vunpack.c.l.b16 %v1144
    %v1218 = vunpack.c.l.b16 %v1145
    %v1219 = vunpack.c.l.b16 %v1146
    %v1220 = vunpack.c.l.b16 %v1147
    %v1221 = vunpack.c.l.b16 %v1148
    %v1222 = vpack.c.b16 %v1191, %v1190
    %v1223 = vpack.c.b16 %v1193, %v1192
    %v1224 = vpack.c.b16 %v1195, %v1194
    %v1225 = vpack.c.b16 %v1197, %v1196
    %v1226 = vpack.c.b16 %v1199, %v1198
    %v1227 = vpack.c.b16 %v1201, %v1200
    %v1228 = vpack.c.b16 %v1203, %v1202
    %v1229 = vpack.c.b16 %v1205, %v1204
    %v1230 = vpack.c.b16 %v1207, %v1206
    %v1231 = vpack.c.b16 %v1209, %v1208
    %v1232 = vpack.c.b16 %v1211, %v1210
    %v1233 = vpack.c.b16 %v1213, %v1212
    %v1234 = vpack.c.b16 %v1215, %v1214
    %v1235 = vpack.c.b16 %v1217, %v1216
    %v1236 = vpack.c.b16 %v1219, %v1218
    %v1237 = vpack.c.b16 %v1221, %v1220
    %1254 = vmatprep.subr.bf16.mxu0 0
    %1255 = vmatpush1.bf16.msra.mxu0 %v1229
    %1256 = vmatprep.subr.bf16.mxu0 0
    %1257 = vmatpush1.bf16.msra.mxu0 %v1228
    %1258 = vmatprep.subr.bf16.mxu0 0
    %1259 = vmatpush1.bf16.msra.mxu0 %v1227
    %1260 = vmatprep.subr.bf16.mxu0 0
    %1261 = vmatpush1.bf16.msra.mxu0 %v1226
    %1262 = vmatprep.subr.bf16.mxu0 0
    %1263 = vmatpush1.bf16.msra.mxu0 %v1225
    %1264 = vmatprep.subr.bf16.mxu0 0
    %1265 = vmatpush1.bf16.msra.mxu0 %v1224
    %1266 = vmatprep.subr.bf16.mxu0 0
    %1267 = vmatpush1.bf16.msra.mxu0 %v1223
    %1268 = vmatprep.subr.bf16.mxu0 0
    %1269 = vmatpush1.bf16.msra.mxu0 %v1222
    %1270 = vmatprep.subr.bf16.mxu0 0
    %1271 = vmatpush2.bf16.msra.mxu0 %v1237
    %1272 = vmatprep.subr.bf16.mxu0 0
    %1273 = vmatpush2.bf16.msra.mxu0 %v1236
    %1274 = vmatprep.subr.bf16.mxu0 0
    %1275 = vmatpush2.bf16.msra.mxu0 %v1235
    %1276 = vmatprep.subr.bf16.mxu0 0
    %1277 = vmatpush2.bf16.msra.mxu0 %v1234
    %1278 = vmatprep.subr.bf16.mxu0 0
    %1279 = vmatpush2.bf16.msra.mxu0 %v1233
    %1280 = vmatprep.subr.bf16.mxu0 0
    %1281 = vmatpush2.bf16.msra.mxu0 %v1232
    %1282 = vmatprep.subr.bf16.mxu0 0
    %1283 = vmatpush2.bf16.msra.mxu0 %v1231
    %1284 = vmatprep.subr.bf16.mxu0 0
    %1285 = vmatpush2.bf16.msra.mxu0 %v1230
    %1286 = vmatprep.mubr.bf16.mxu0 %v1150
    %1287 = vmatmul.mubr.bf16.gmra.mxu0 %v1149
    %v1288 = vpop.f32.mrf.mxu0
    %v1289 = vadd.f32 %v1156, %v1288
    %v1290 = vpop.f32.mrf.mxu0
    %v1291 = vpop.f32.mrf.mxu0
    %v1292 = vpop.f32.mrf.mxu0
    %1293 = vdwg.mxu0
    %1294 = vst [vmem:[#allocation8] sm:$0xff] %v1289
    // Predicated region
    $region34: #{tpu_custom_call.1} parent=1 // pred_check
      _
    $region35: #{tpu_custom_call.1} parent=1 // pred_check_branch
      %1296 = sbr.rel (0) target = $region37
    $region36: #{tpu_custom_call.1} parent=1 // pred_region
      %s1298 = ssub.s32 128, 32
      %1299 = vsyncadd [#allocation4], %s1298
      %s1300 = sshll.u32 [#allocation8], 4
      %s1301 = int_to_ptr.vmem [resolvable:$true] %s1300
      %1306 = dma.vmem_to_hbm [thread:$0]  %s1301, 32, %s5, [#allocation4], 32, 32, 2
    $region37: #{tpu_custom_call.1} parent=1 // pred_fallthru
      _
    // Predicated region
    $region38: #{tpu_custom_call.1} parent=1 // pred_check
      _
    $region39: #{tpu_custom_call.1} parent=1 // pred_check_branch
      %1308 = sbr.rel (0) target = $region41
    $region40: #{tpu_custom_call.1} parent=1 // pred_region
      %1309 = dma.done [#allocation4], 128
    $region41: #{tpu_custom_call.1} parent=1 // pred_fallthru
      _
    %1310 = vsyncpa [#allocation3], 1
    %1311 = vsyncpa [#allocation6], 1
    %1312 = vsyncpa [#allocation4], 1

</llo_original>
